<compile_context>
chip_gen: v6e
topology: v6e:2x2x1
jax: 0.10.0
libtpu: 0.0.40
codegen_flags: <defaults>
</compile_context>

<pallas_src>
import jax
import jax.numpy as jnp
from jax.experimental import pallas as pl
from jax.experimental.pallas import tpu as pltpu


# ----------------------------------------------------------------------------
# Fused per-graph forward kernel (one graph per grid step)
# ----------------------------------------------------------------------------
def gcn_forward_kernel(a_ref, x_ref,
                       w1_ref, b1_ref,
                       w2_ref, b2_ref,
                       w3e_ref, b3e_ref,
                       l1we_ref, l1b_ref,
                       l2wp_ref, l2bp_ref,
                       out_ref):
    A = a_ref[...]                       # (N, N)  normalized adjacency
    h = x_ref[...]                       # (N, Fp) zero-padded node features

    # ---- conv1 + relu ----
    h = jnp.dot(h, w1_ref[...], preferred_element_type=jnp.float32)
    h = jnp.maximum(jnp.dot(A, h, preferred_element_type=jnp.float32) + b1_ref[...], 0.0)

    # ---- conv2 + relu ----
    h = jnp.dot(h, w2_ref[...], preferred_element_type=jnp.float32)
    h = jnp.maximum(jnp.dot(A, h, preferred_element_type=jnp.float32) + b2_ref[...], 0.0)

    # ---- conv3 with gate_nn folded in: columns of hg = [gate | ones | h3] ----
    hg = jnp.dot(h, w3e_ref[...], preferred_element_type=jnp.float32)
    hg = jnp.dot(A, hg, preferred_element_type=jnp.float32) + b3e_ref[...]   # (N, H+2)

    # ---- GlobalAttention pooling (single graph: softmax over all nodes) ----
    gate = hg[:, 0:1]                                             # (N, 1)
    e = jnp.exp(gate - jnp.max(gate, axis=0, keepdims=True))      # (N, 1)
    # One fused sublane reduction yields both the attention-weighted feature
    # sum and (via the "ones" column) the softmax denominator.
    srow = jnp.sum(e * hg, axis=0, keepdims=True)                 # (1, H+2)
    pooled = srow * pl.reciprocal(srow[:, 1:2], approx=True)      # (1, H+2)

    # ---- lin1 + relu (zero rows of l1we drop the gate/denominator columns) ----
    z = jnp.dot(pooled, l1we_ref[...], preferred_element_type=jnp.float32) + l1b_ref[...]
    z = jnp.maximum(z, 0.0)

    # ---- dropout (eval mode -> identity) + lin2 (lane-dense padded head) ----
    out = jnp.dot(z, l2wp_ref[...], preferred_element_type=jnp.float32) + l2bp_ref[...]
    out_ref[...] = out.astype(out_ref.dtype)                      # (1, 128)


def gcn_forward(a_hat, x, params):
    """Fused GCN forward for a batch of B independent graphs.

    a_hat: (B, N, N) normalized adjacency per graph.
    x:     (B, N, F) node features per graph.
    Returns (B, num_classes).
    """
    (w1, b1, w2, b2, w3, b3, gw, gb, l1w, l1b, l2w, l2b) = params
    B, N, F = x.shape
    H = w1.shape[1]
    C = l2w.shape[1]
    LANE = 128
    Fp = ((F + LANE - 1) // LANE) * LANE   # 149 -> 256: lane-aligned first matmul
    Cp = LANE                              # lane-dense output row

    # -------- wrapper-side algebraic folding / padding (plain JAX, once) ------
    x_p = jnp.pad(x, ((0, 0), (0, 0), (0, Fp - F)))
    w1_p = jnp.pad(w1, ((0, Fp - F), (0, 0)))
    # gate_nn folded into conv3:   hg columns = [gate | ones | h3]
    w3e = jnp.concatenate([w3 @ gw, jnp.zeros((H, 1), w3.dtype), w3], axis=1)
    b3e = jnp.concatenate([b3 @ gw + gb, jnp.ones((1, 1), b3.dtype), b3], axis=1)
    # lin1 extended with two zero rows so gate/denominator columns vanish
    l1we = jnp.concatenate([jnp.zeros((2, H), l1w.dtype), l1w], axis=0)
    # lane-dense head: pad the C-class output to 128 lanes
    l2wp = jnp.pad(l2w, ((0, 0), (0, Cp - C)))
    l2bp = jnp.pad(l2b, ((0, 0), (0, Cp - C)))

    args = (a_hat, x_p, w1_p, b1, w2, b2, w3e, b3e, l1we, l1b, l2wp, l2bp)

    in_specs = [
        pl.BlockSpec((None, N, N), lambda b: (b, 0, 0)),     # per-graph A_hat
        pl.BlockSpec((None, N, Fp), lambda b: (b, 0, 0)),    # per-graph features
    ] + [
        # Weights / biases: constant block index -> resident across grid steps.
        pl.BlockSpec(w.shape, lambda b: (0, 0)) for w in args[2:]
    ]
    out_spec = pl.BlockSpec((None, 1, Cp), lambda b: (b, 0, 0))

    out = pl.pallas_call(
        gcn_forward_kernel,
        out_shape=jax.ShapeDtypeStruct((B, 1, Cp), jnp.float32),
        grid=(B,),
        in_specs=in_specs,
        out_specs=out_spec,
        compiler_params=pltpu.CompilerParams(
            dimension_semantics=("parallel",)),   # shards graphs across TCs on v7x
    )(*args)
    return out.reshape(B, Cp)[:, :C]


# ----------------------------------------------------------------------------
# Plain-JAX glue: densify the GCNConv normalization (add_self_loops=False)
# ----------------------------------------------------------------------------
def build_normalized_adjacency(edge_index, edge_attr, num_nodes):
    row, col = edge_index[0], edge_index[1]          # source, target
    w = edge_attr.astype(jnp.float32)
    deg = jnp.zeros((num_nodes,), jnp.float32).at[col].add(w)
    deg_inv_sqrt = jnp.where(deg > 0, jax.lax.rsqrt(jnp.maximum(deg, 1e-12)), 0.0)
    norm = deg_inv_sqrt[row] * w * deg_inv_sqrt[col]
    # out_i = sum_{edges (j->i)} norm * x_j   =>   A_hat[i, j] += norm
    a_hat = jnp.zeros((num_nodes, num_nodes), jnp.float32).at[col, row].add(norm)
    return a_hat


def init_params(key, num_node_features, hidden, num_classes):
    ks = jax.random.split(key, 8)

    def glorot(k, fan_in, fan_out):
        limit = jnp.sqrt(6.0 / (fan_in + fan_out))
        return jax.random.uniform(k, (fan_in, fan_out), jnp.float32, -limit, limit)

    w1 = glorot(ks[0], num_node_features, hidden)
    b1 = jnp.zeros((1, hidden), jnp.float32)
    w2 = glorot(ks[1], hidden, hidden)
    b2 = jnp.zeros((1, hidden), jnp.float32)
    w3 = glorot(ks[2], hidden, hidden)
    b3 = jnp.zeros((1, hidden), jnp.float32)
    gw = glorot(ks[3], hidden, 1)                    # gate_nn: Linear(hidden, 1)
    gb = jnp.zeros((1, 1), jnp.float32)
    l1w = glorot(ks[4], hidden, hidden)              # lin1
    l1b = 0.01 * jax.random.normal(ks[5], (1, hidden), jnp.float32)
    l2w = glorot(ks[6], hidden, num_classes)         # lin2
    l2b = 0.01 * jax.random.normal(ks[7], (1, num_classes), jnp.float32)
    return (w1, b1, w2, b2, w3, b3, gw, gb, l1w, l1b, l2w, l2b)


# ----------------------------------------------------------------------------
# Pure-JAX reference (unfolded, original math) for a loose sanity check
# ----------------------------------------------------------------------------
def gcn_reference(a_hat, x, params):
    (w1, b1, w2, b2, w3, b3, gw, gb, l1w, l1b, l2w, l2b) = params

    def single(A, X):
        h = jax.nn.relu(A @ (X @ w1) + b1)
        h = jax.nn.relu(A @ (h @ w2) + b2)
        h = A @ (h @ w3) + b3
        gate = h @ gw + gb                       # (N, 1)
        alpha = jax.nn.softmax(gate, axis=0)
        pooled = jnp.sum(alpha * h, axis=0, keepdims=True)
        z = jax.nn.relu(pooled @ l1w + l1b)
        return (z @ l2w + l2b)[0]

    return jax.vmap(single)(a_hat, x)


if __name__ == "__main__":
    num_node_features = 149
    hidden_channels = 32
    num_classes = 3
    num_nodes = 16
    num_edges = 40
    num_graphs = 4

    key = jax.random.PRNGKey(0)
    kx, ke, kw, kp = jax.random.split(key, 4)

    # Batch of independent random graphs (same node count each).
    x = jax.random.normal(kx, (num_graphs, num_nodes, num_node_features), jnp.float32)
    edge_index = jax.random.randint(ke, (num_graphs, 2, num_edges), 0, num_nodes, jnp.int32)
    edge_attr = jax.random.uniform(kw, (num_graphs, num_edges), jnp.float32, 0.1, 1.0)

    a_hat = jax.vmap(
        lambda ei, ea: build_normalized_adjacency(ei, ea, num_nodes)
    )(edge_index, edge_attr)
    params = init_params(kp, num_node_features, hidden_channels, num_classes)

    out = gcn_forward(a_hat, x, params)
    out = jax.block_until_ready(out)
    assert out.shape == (num_graphs, num_classes)
    assert bool(jnp.all(jnp.isfinite(out)))

    ref = gcn_reference(a_hat, x, params)
    # Loose tolerance: approx reciprocal (~1e-3 rel) + TPU matmul rounding.
    assert bool(jnp.allclose(out, ref, rtol=5e-2, atol=5e-2))
    print("KERNEL_OK")
</pallas_src>

<mosaic_0001>
module attributes {stable_mosaic.version = 11 : i64} {
  func.func @gcn_forward_kernel(%arg0: i32, %arg1: memref<1x16x16xf32, #tpu.memory_space<vmem>>, %arg2: memref<1x16x256xf32, #tpu.memory_space<vmem>>, %arg3: memref<256x32xf32, #tpu.memory_space<vmem>>, %arg4: memref<1x32xf32, #tpu.memory_space<vmem>>, %arg5: memref<32x32xf32, #tpu.memory_space<vmem>>, %arg6: memref<1x32xf32, #tpu.memory_space<vmem>>, %arg7: memref<32x34xf32, #tpu.memory_space<vmem>>, %arg8: memref<1x34xf32, #tpu.memory_space<vmem>>, %arg9: memref<34x32xf32, #tpu.memory_space<vmem>>, %arg10: memref<1x32xf32, #tpu.memory_space<vmem>>, %arg11: memref<32x128xf32, #tpu.memory_space<vmem>>, %arg12: memref<1x128xf32, #tpu.memory_space<vmem>>, %arg13: memref<1x1x128xf32, #tpu.memory_space<vmem>>) attributes {dimension_semantics = [#tpu.dimension_semantics<parallel>], iteration_bounds = array<i64: 4>, scalar_prefetch = 0 : i64, scratch_operands = 0 : i64, tpu.core_type = #tpu.core_type<tc>, window_params = [{transform_indices = @transform_0, window_bounds = array<i64: 1, 16, 16>}, {transform_indices = @transform_1, window_bounds = array<i64: 1, 16, 256>}, {pipeline_mode = #tpu.pipeline_mode<synchronous>, transform_indices = @transform_2, window_bounds = array<i64: 256, 32>}, {pipeline_mode = #tpu.pipeline_mode<synchronous>, transform_indices = @transform_3, window_bounds = array<i64: 1, 32>}, {pipeline_mode = #tpu.pipeline_mode<synchronous>, transform_indices = @transform_4, window_bounds = array<i64: 32, 32>}, {pipeline_mode = #tpu.pipeline_mode<synchronous>, transform_indices = @transform_5, window_bounds = array<i64: 1, 32>}, {pipeline_mode = #tpu.pipeline_mode<synchronous>, transform_indices = @transform_6, window_bounds = array<i64: 32, 34>}, {pipeline_mode = #tpu.pipeline_mode<synchronous>, transform_indices = @transform_7, window_bounds = array<i64: 1, 34>}, {pipeline_mode = #tpu.pipeline_mode<synchronous>, transform_indices = @transform_8, window_bounds = array<i64: 34, 32>}, {pipeline_mode = #tpu.pipeline_mode<synchronous>, transform_indices = @transform_9, window_bounds = array<i64: 1, 32>}, {pipeline_mode = #tpu.pipeline_mode<synchronous>, transform_indices = @transform_10, window_bounds = array<i64: 32, 128>}, {pipeline_mode = #tpu.pipeline_mode<synchronous>, transform_indices = @transform_11, window_bounds = array<i64: 1, 128>}, {transform_indices = @transform_12, window_bounds = array<i64: 1, 1, 128>}]} {
    %c0 = arith.constant 0 : index
    %c0_0 = arith.constant 0 : index
    %c0_1 = arith.constant 0 : index
    %0 = vector.load %arg1[%c0, %c0_0, %c0_1] : memref<1x16x16xf32, #tpu.memory_space<vmem>>, vector<1x16x16xf32>
    %1 = vector.shape_cast %0 : vector<1x16x16xf32> to vector<16x16xf32>
    %c0_2 = arith.constant 0 : index
    %c0_3 = arith.constant 0 : index
    %c0_4 = arith.constant 0 : index
    %2 = vector.load %arg2[%c0_2, %c0_3, %c0_4] : memref<1x16x256xf32, #tpu.memory_space<vmem>>, vector<1x16x256xf32>
    %3 = vector.shape_cast %2 : vector<1x16x256xf32> to vector<16x256xf32>
    %c0_5 = arith.constant 0 : index
    %c0_6 = arith.constant 0 : index
    %4 = vector.load %arg3[%c0_5, %c0_6] : memref<256x32xf32, #tpu.memory_space<vmem>>, vector<256x32xf32>
    %cst = arith.constant dense<0.000000e+00> : vector<16x32xf32>
    %5 = tpu.matmul %3, %4, %cst {dimension_numbers = #tpu.dot_dimension_numbers<[1], [0], [0], [1], [0, 0, 1, 1], [], []>} : vector<16x256xf32>, vector<256x32xf32>, vector<16x32xf32> -> vector<16x32xf32>
    %cst_7 = arith.constant dense<0.000000e+00> : vector<16x32xf32>
    %6 = tpu.matmul %1, %5, %cst_7 {dimension_numbers = #tpu.dot_dimension_numbers<[1], [0], [0], [1], [0, 0, 1, 1], [], []>} : vector<16x16xf32>, vector<16x32xf32>, vector<16x32xf32> -> vector<16x32xf32>
    %c0_8 = arith.constant 0 : index
    %c0_9 = arith.constant 0 : index
    %7 = vector.load %arg4[%c0_8, %c0_9] : memref<1x32xf32, #tpu.memory_space<vmem>>, vector<1x32xf32>
    %8 = vector.broadcast %7 : vector<1x32xf32> to vector<16x32xf32>
    %9 = arith.addf %6, %8 : vector<16x32xf32>
    %cst_10 = arith.constant 0.000000e+00 : f32
    %10 = vector.broadcast %cst_10 : f32 to vector<16x32xf32>
    %11 = arith.maximumf %9, %10 : vector<16x32xf32>
    %c0_11 = arith.constant 0 : index
    %c0_12 = arith.constant 0 : index
    %12 = vector.load %arg5[%c0_11, %c0_12] : memref<32x32xf32, #tpu.memory_space<vmem>>, vector<32x32xf32>
    %cst_13 = arith.constant dense<0.000000e+00> : vector<16x32xf32>
    %13 = tpu.matmul %11, %12, %cst_13 {dimension_numbers = #tpu.dot_dimension_numbers<[1], [0], [0], [1], [0, 0, 1, 1], [], []>} : vector<16x32xf32>, vector<32x32xf32>, vector<16x32xf32> -> vector<16x32xf32>
    %cst_14 = arith.constant dense<0.000000e+00> : vector<16x32xf32>
    %14 = tpu.matmul %1, %13, %cst_14 {dimension_numbers = #tpu.dot_dimension_numbers<[1], [0], [0], [1], [0, 0, 1, 1], [], []>} : vector<16x16xf32>, vector<16x32xf32>, vector<16x32xf32> -> vector<16x32xf32>
    %c0_15 = arith.constant 0 : index
    %c0_16 = arith.constant 0 : index
    %15 = vector.load %arg6[%c0_15, %c0_16] : memref<1x32xf32, #tpu.memory_space<vmem>>, vector<1x32xf32>
    %16 = vector.broadcast %15 : vector<1x32xf32> to vector<16x32xf32>
    %17 = arith.addf %14, %16 : vector<16x32xf32>
    %cst_17 = arith.constant 0.000000e+00 : f32
    %18 = vector.broadcast %cst_17 : f32 to vector<16x32xf32>
    %19 = arith.maximumf %17, %18 : vector<16x32xf32>
    %c0_18 = arith.constant 0 : index
    %c0_19 = arith.constant 0 : index
    %20 = vector.load %arg7[%c0_18, %c0_19] : memref<32x34xf32, #tpu.memory_space<vmem>>, vector<32x34xf32>
    %cst_20 = arith.constant dense<0.000000e+00> : vector<16x34xf32>
    %21 = tpu.matmul %19, %20, %cst_20 {dimension_numbers = #tpu.dot_dimension_numbers<[1], [0], [0], [1], [0, 0, 1, 1], [], []>} : vector<16x32xf32>, vector<32x34xf32>, vector<16x34xf32> -> vector<16x34xf32>
    %cst_21 = arith.constant dense<0.000000e+00> : vector<16x34xf32>
    %22 = tpu.matmul %1, %21, %cst_21 {dimension_numbers = #tpu.dot_dimension_numbers<[1], [0], [0], [1], [0, 0, 1, 1], [], []>} : vector<16x16xf32>, vector<16x34xf32>, vector<16x34xf32> -> vector<16x34xf32>
    %c0_22 = arith.constant 0 : index
    %c0_23 = arith.constant 0 : index
    %23 = vector.load %arg8[%c0_22, %c0_23] : memref<1x34xf32, #tpu.memory_space<vmem>>, vector<1x34xf32>
    %24 = vector.broadcast %23 : vector<1x34xf32> to vector<16x34xf32>
    %25 = arith.addf %22, %24 : vector<16x34xf32>
    %26 = vector.extract_strided_slice %25 {offsets = [0, 0], sizes = [16, 1], strides = [1, 1]} : vector<16x34xf32> to vector<16x1xf32>
    %cst_24 = arith.constant dense<0xFF800000> : vector<1xf32>
    %27 = vector.multi_reduction <maximumf>, %26, %cst_24 [0] : vector<16x1xf32> to vector<1xf32>
    %28 = vector.shape_cast %27 : vector<1xf32> to vector<1x1xf32>
    %29 = vector.broadcast %28 : vector<1x1xf32> to vector<16x1xf32>
    %30 = arith.subf %26, %29 : vector<16x1xf32>
    %31 = math.exp %30 : vector<16x1xf32>
    %32 = vector.broadcast %31 : vector<16x1xf32> to vector<16x34xf32>
    %33 = arith.mulf %32, %25 : vector<16x34xf32>
    %cst_25 = arith.constant dense<0.000000e+00> : vector<34xf32>
    %34 = vector.multi_reduction <add>, %33, %cst_25 [0] : vector<16x34xf32> to vector<34xf32>
    %35 = vector.shape_cast %34 : vector<34xf32> to vector<1x34xf32>
    %36 = vector.extract_strided_slice %35 {offsets = [0, 1], sizes = [1, 1], strides = [1, 1]} : vector<1x34xf32> to vector<1x1xf32>
    %37 = tpu.reciprocal %36 {approx = true} : vector<1x1xf32> -> vector<1x1xf32>
    %38 = vector.broadcast %37 : vector<1x1xf32> to vector<1x34xf32>
    %39 = arith.mulf %35, %38 : vector<1x34xf32>
    %c0_26 = arith.constant 0 : index
    %c0_27 = arith.constant 0 : index
    %40 = vector.load %arg9[%c0_26, %c0_27] : memref<34x32xf32, #tpu.memory_space<vmem>>, vector<34x32xf32>
    %cst_28 = arith.constant dense<0.000000e+00> : vector<1x32xf32>
    %41 = tpu.matmul %39, %40, %cst_28 {dimension_numbers = #tpu.dot_dimension_numbers<[1], [0], [0], [1], [0, 0, 1, 1], [], []>} : vector<1x34xf32>, vector<34x32xf32>, vector<1x32xf32> -> vector<1x32xf32>
    %c0_29 = arith.constant 0 : index
    %c0_30 = arith.constant 0 : index
    %42 = vector.load %arg10[%c0_29, %c0_30] : memref<1x32xf32, #tpu.memory_space<vmem>>, vector<1x32xf32>
    %43 = arith.addf %41, %42 : vector<1x32xf32>
    %cst_31 = arith.constant 0.000000e+00 : f32
    %44 = vector.broadcast %cst_31 : f32 to vector<1x32xf32>
    %45 = arith.maximumf %43, %44 : vector<1x32xf32>
    %c0_32 = arith.constant 0 : index
    %c0_33 = arith.constant 0 : index
    %46 = vector.load %arg11[%c0_32, %c0_33] : memref<32x128xf32, #tpu.memory_space<vmem>>, vector<32x128xf32>
    %cst_34 = arith.constant dense<0.000000e+00> : vector<1x128xf32>
    %47 = tpu.matmul %45, %46, %cst_34 {dimension_numbers = #tpu.dot_dimension_numbers<[1], [0], [0], [1], [0, 0, 1, 1], [], []>} : vector<1x32xf32>, vector<32x128xf32>, vector<1x128xf32> -> vector<1x128xf32>
    %c0_35 = arith.constant 0 : index
    %c0_36 = arith.constant 0 : index
    %48 = vector.load %arg12[%c0_35, %c0_36] : memref<1x128xf32, #tpu.memory_space<vmem>>, vector<1x128xf32>
    %49 = arith.addf %47, %48 : vector<1x128xf32>
    %c0_37 = arith.constant 0 : index
    %c0_38 = arith.constant 0 : index
    %c0_39 = arith.constant 0 : index
    %50 = vector.load %arg13[%c0_37, %c0_38, %c0_39] : memref<1x1x128xf32, #tpu.memory_space<vmem>>, vector<1x1x128xf32>
    %51 = vector.shape_cast %50 : vector<1x1x128xf32> to vector<1x128xf32>
    %52 = vector.shape_cast %49 : vector<1x128xf32> to vector<1x1x128xf32>
    tpu.vector_store %arg13[%c0_37, %c0_38, %c0_39], %52 {strides = array<i32>} : memref<1x1x128xf32, #tpu.memory_space<vmem>>, vector<1x1x128xf32>,
    return
  }
  func.func @transform_0(%arg0: i32) -> (i32, i32, i32) {
    %c0_i32 = arith.constant 0 : i32
    %c0_i32_0 = arith.constant 0 : i32
    %c0_i32_1 = arith.constant 0 : i32
    return %arg0, %c0_i32, %c0_i32_0 : i32, i32, i32
  }
  func.func @transform_1(%arg0: i32) -> (i32, i32, i32) {
    %c0_i32 = arith.constant 0 : i32
    %c0_i32_0 = arith.constant 0 : i32
    %c0_i32_1 = arith.constant 0 : i32
    return %arg0, %c0_i32, %c0_i32_0 : i32, i32, i32
  }
  func.func @transform_2(%arg0: i32) -> (i32, i32) {
    %c0_i32 = arith.constant 0 : i32
    %c0_i32_0 = arith.constant 0 : i32
    %c0_i32_1 = arith.constant 0 : i32
    return %c0_i32, %c0_i32_0 : i32, i32
  }
  func.func @transform_3(%arg0: i32) -> (i32, i32) {
    %c0_i32 = arith.constant 0 : i32
    %c0_i32_0 = arith.constant 0 : i32
    %c0_i32_1 = arith.constant 0 : i32
    return %c0_i32, %c0_i32_0 : i32, i32
  }
  func.func @transform_4(%arg0: i32) -> (i32, i32) {
    %c0_i32 = arith.constant 0 : i32
    %c0_i32_0 = arith.constant 0 : i32
    %c0_i32_1 = arith.constant 0 : i32
    return %c0_i32, %c0_i32_0 : i32, i32
  }
  func.func @transform_5(%arg0: i32) -> (i32, i32) {
    %c0_i32 = arith.constant 0 : i32
    %c0_i32_0 = arith.constant 0 : i32
    %c0_i32_1 = arith.constant 0 : i32
    return %c0_i32, %c0_i32_0 : i32, i32
  }
  func.func @transform_6(%arg0: i32) -> (i32, i32) {
    %c0_i32 = arith.constant 0 : i32
    %c0_i32_0 = arith.constant 0 : i32
    %c0_i32_1 = arith.constant 0 : i32
    return %c0_i32, %c0_i32_0 : i32, i32
  }
  func.func @transform_7(%arg0: i32) -> (i32, i32) {
    %c0_i32 = arith.constant 0 : i32
    %c0_i32_0 = arith.constant 0 : i32
    %c0_i32_1 = arith.constant 0 : i32
    return %c0_i32, %c0_i32_0 : i32, i32
  }
  func.func @transform_8(%arg0: i32) -> (i32, i32) {
    %c0_i32 = arith.constant 0 : i32
    %c0_i32_0 = arith.constant 0 : i32
    %c0_i32_1 = arith.constant 0 : i32
    return %c0_i32, %c0_i32_0 : i32, i32
  }
  func.func @transform_9(%arg0: i32) -> (i32, i32) {
    %c0_i32 = arith.constant 0 : i32
    %c0_i32_0 = arith.constant 0 : i32
    %c0_i32_1 = arith.constant 0 : i32
    return %c0_i32, %c0_i32_0 : i32, i32
  }
  func.func @transform_10(%arg0: i32) -> (i32, i32) {
    %c0_i32 = arith.constant 0 : i32
    %c0_i32_0 = arith.constant 0 : i32
    %c0_i32_1 = arith.constant 0 : i32
    return %c0_i32, %c0_i32_0 : i32, i32
  }
  func.func @transform_11(%arg0: i32) -> (i32, i32) {
    %c0_i32 = arith.constant 0 : i32
    %c0_i32_0 = arith.constant 0 : i32
    %c0_i32_1 = arith.constant 0 : i32
    return %c0_i32, %c0_i32_0 : i32, i32
  }
  func.func @transform_12(%arg0: i32) -> (i32, i32, i32) {
    %c0_i32 = arith.constant 0 : i32
    %c0_i32_0 = arith.constant 0 : i32
    %c0_i32_1 = arith.constant 0 : i32
    return %arg0, %c0_i32, %c0_i32_0 : i32, i32, i32
  }
}

</mosaic_0001>

<llo_original>
// kernel: tpu_custom_call.1
$region0: #{tpu_custom_call.1}
  #allocation0 [shape = 'u32[]', space=smem, size = 0x4, offset = 0x4, fixed_abs, tag = 'smem constant byte address 0x4 - core index']
  #allocation1 [shape = 'u32[144,128]{1,0:T(1,128)}', space=vmem, size = 0x12000, scoped, tag = 'internal scratch']
  %s0 = inlined_call_operand.vmem [shape: f32[4,16,16], index: 0, kind: input, shape index: {}]
  %s1 = inlined_call_operand.vmem [shape: f32[4,16,256], index: 1, kind: input, shape index: {}]
  %s2 = inlined_call_operand.vmem [shape: f32[256,32], index: 2, kind: input, shape index: {}]
  %s3 = inlined_call_operand.vmem [shape: f32[1,32], index: 3, kind: input, shape index: {}]
  %s4 = inlined_call_operand.vmem [shape: f32[32,32], index: 4, kind: input, shape index: {}]
  %s5 = inlined_call_operand.vmem [shape: f32[1,32], index: 5, kind: input, shape index: {}]
  %s6 = inlined_call_operand.vmem [shape: f32[32,34], index: 6, kind: input, shape index: {}]
  %s7 = inlined_call_operand.vmem [shape: f32[1,34], index: 7, kind: input, shape index: {}]
  %s8 = inlined_call_operand.vmem [shape: f32[34,32], index: 8, kind: input, shape index: {}]
  %s9 = inlined_call_operand.vmem [shape: f32[1,32], index: 9, kind: input, shape index: {}]
  %s10 = inlined_call_operand.vmem [shape: f32[32,128], index: 10, kind: input, shape index: {}]
  %s11 = inlined_call_operand.vmem [shape: f32[1,128], index: 11, kind: input, shape index: {}]
  %s12 = inlined_call_operand.hbm [shape: f32[4,1,128], index: 12, kind: output, shape index: {}]
  %s13 = sld [smem:[#allocation0]]
  $region81: #{tpu_custom_call.1} parent=0
    _
  %s15 = ssub.s32 1, %s13
  %s16 = scalar_select 0, %s15, %s13
  $region1: #{tpu_custom_call.1} parent=0
    #allocation2 [shape = 'u8[1024]{0}', space=vmem, size = 0x400, scoped, tag = 'output window, operand 0']
    #allocation3 [shape = 's32[2]{0}', space=sflag, size = 0x8, scoped, tag = 'scoped memory for tpu_custom_call.1']
    %17 = vsyncpa [#allocation3], 0
    %s18 = scalar_lea.sflag [#allocation3], 1
    %19 = vsyncpa %s18, 0
    loop: start=0, step=1, limit=6
    $region2: #{tpu_custom_call.1} parent=1 // loop_pre_header
      _
    $region3: #{tpu_custom_call.1} parent=1 // loop_header
      %s21 = sphi 0, %s25
      %p22 = scmp.ge.s32.totalorder %s21, 6
      %s31 = sphi 0, %s33
      %s34 = sphi 0, %s31
      %s35 = sphi 0, %s34
      %s51 = sphi 0, %s35
      %s57 = sphi 0, %s59
      %s60 = sphi 0, %s57
      %s61 = sphi 0, %s60
      %s77 = sphi 0, %s61
      %s81 = sphi 0, %s81
      %s83 = sphi 0, %s81
      %s84 = sphi 0, %s83
      %s98 = sphi 0, %s84
      %s102 = sphi 0, %s102
      %s104 = sphi 0, %s102
      %s105 = sphi 0, %s104
      %s119 = sphi 0, %s105
      %s123 = sphi 0, %s123
      %s125 = sphi 0, %s123
      %s126 = sphi 0, %s125
      %s140 = sphi 0, %s126
      %s144 = sphi 0, %s144
      %s146 = sphi 0, %s144
      %s147 = sphi 0, %s146
      %s161 = sphi 0, %s147
      %s165 = sphi 0, %s165
      %s167 = sphi 0, %s165
      %s168 = sphi 0, %s167
      %s182 = sphi 0, %s168
      %s186 = sphi 0, %s186
      %s188 = sphi 0, %s186
      %s189 = sphi 0, %s188
      %s203 = sphi 0, %s189
      %s207 = sphi 0, %s207
      %s209 = sphi 0, %s207
      %s210 = sphi 0, %s209
      %s224 = sphi 0, %s210
      %s228 = sphi 0, %s228
      %s230 = sphi 0, %s228
      %s231 = sphi 0, %s230
      %s245 = sphi 0, %s231
      %s249 = sphi 0, %s249
      %s251 = sphi 0, %s249
      %s252 = sphi 0, %s251
      %s266 = sphi 0, %s252
      %s270 = sphi 0, %s270
      %s272 = sphi 0, %s270
      %s273 = sphi 0, %s272
      %s287 = sphi 0, %s273
      %s293 = sphi 0, %s295
      %s296 = sphi 0, %s293
      %s297 = sphi 0, %s296
      %s313 = sphi 0, %s297
    $region4: #{tpu_custom_call.1} parent=1 // loop_header_branch
      %24 = sbr.rel (%p22) target = $region8
    $region5: #{tpu_custom_call.1} parent=1 // loop_body
      %s26 = ssub.s32 %s21, 1
      %s27 = ssub.s32 %s21, 2
      %s28 = sadd.s32 %s21, 1
      %s29 = ssub.s32 %s21, %s28
      %p30 = scmp.eq.s32.totalorder %s29, 0
      %s32 = sadd.s32 %s31, 1
      %s33 = scalar_select %p30, %s31, %s32
      %p36 = pneg %p30
      %p37 = scmp.eq.s32.totalorder %s21, 3
      %p38 = por %p36, %p37
      %p39 = scmp.ne.s32.totalorder %s31, %s34
      %p40 = scmp.eq.s32.totalorder %s21, 0
      %p41 = por %p39, %p40
      %p42 = scmp.ne.s32.totalorder %s31, %s34
      %p43 = scmp.eq.s32.totalorder %s26, 3
      %p44 = por %p42, %p43
      %p45 = scmp.ne.s32.totalorder %s34, %s35
      %p46 = scmp.eq.s32.totalorder %s26, 0
      %p47 = por %p45, %p46
      %p48 = scmp.ne.s32.totalorder %s34, %s35
      %p49 = scmp.eq.s32.totalorder %s27, 3
      %p50 = por %p48, %p49
      %p52 = scmp.ne.s32.totalorder %s35, %s51
      %p53 = scmp.eq.s32.totalorder %s27, 0
      %p54 = por %p52, %p53
      %s55 = ssub.s32 %s21, %s28
      %p56 = scmp.eq.s32.totalorder %s55, 0
      %s58 = sadd.s32 %s57, 1
      %s59 = scalar_select %p56, %s57, %s58
      %p62 = pneg %p56
      %p63 = scmp.eq.s32.totalorder %s21, 3
      %p64 = por %p62, %p63
      %p65 = scmp.ne.s32.totalorder %s57, %s60
      %p66 = scmp.eq.s32.totalorder %s21, 0
      %p67 = por %p65, %p66
      %p68 = scmp.ne.s32.totalorder %s57, %s60
      %p69 = scmp.eq.s32.totalorder %s26, 3
      %p70 = por %p68, %p69
      %p71 = scmp.ne.s32.totalorder %s60, %s61
      %p72 = scmp.eq.s32.totalorder %s26, 0
      %p73 = por %p71, %p72
      %p74 = scmp.ne.s32.totalorder %s60, %s61
      %p75 = scmp.eq.s32.totalorder %s27, 3
      %p76 = por %p74, %p75
      %p78 = scmp.ne.s32.totalorder %s61, %s77
      %p79 = scmp.eq.s32.totalorder %s27, 0
      %p80 = por %p78, %p79
      %s82 = sadd.s32 %s81, 1
      %p85 = scmp.eq.s32.totalorder %s21, 3
      %p86 = scmp.ne.s32.totalorder %s81, %s83
      %p87 = scmp.eq.s32.totalorder %s21, 0
      %p88 = por %p86, %p87
      %p89 = scmp.ne.s32.totalorder %s81, %s83
      %p90 = scmp.eq.s32.totalorder %s26, 3
      %p91 = por %p89, %p90
      %p92 = scmp.ne.s32.totalorder %s83, %s84
      %p93 = scmp.eq.s32.totalorder %s26, 0
      %p94 = por %p92, %p93
      %p95 = scmp.ne.s32.totalorder %s83, %s84
      %p96 = scmp.eq.s32.totalorder %s27, 3
      %p97 = por %p95, %p96
      %p99 = scmp.ne.s32.totalorder %s84, %s98
      %p100 = scmp.eq.s32.totalorder %s27, 0
      %p101 = por %p99, %p100
      %s103 = sadd.s32 %s102, 1
      %p106 = scmp.eq.s32.totalorder %s21, 3
      %p107 = scmp.ne.s32.totalorder %s102, %s104
      %p108 = scmp.eq.s32.totalorder %s21, 0
      %p109 = por %p107, %p108
      %p110 = scmp.ne.s32.totalorder %s102, %s104
      %p111 = scmp.eq.s32.totalorder %s26, 3
      %p112 = por %p110, %p111
      %p113 = scmp.ne.s32.totalorder %s104, %s105
      %p114 = scmp.eq.s32.totalorder %s26, 0
      %p115 = por %p113, %p114
      %p116 = scmp.ne.s32.totalorder %s104, %s105
      %p117 = scmp.eq.s32.totalorder %s27, 3
      %p118 = por %p116, %p117
      %p120 = scmp.ne.s32.totalorder %s105, %s119
      %p121 = scmp.eq.s32.totalorder %s27, 0
      %p122 = por %p120, %p121
      %s124 = sadd.s32 %s123, 1
      %p127 = scmp.eq.s32.totalorder %s21, 3
      %p128 = scmp.ne.s32.totalorder %s123, %s125
      %p129 = scmp.eq.s32.totalorder %s21, 0
      %p130 = por %p128, %p129
      %p131 = scmp.ne.s32.totalorder %s123, %s125
      %p132 = scmp.eq.s32.totalorder %s26, 3
      %p133 = por %p131, %p132
      %p134 = scmp.ne.s32.totalorder %s125, %s126
      %p135 = scmp.eq.s32.totalorder %s26, 0
      %p136 = por %p134, %p135
      %p137 = scmp.ne.s32.totalorder %s125, %s126
      %p138 = scmp.eq.s32.totalorder %s27, 3
      %p139 = por %p137, %p138
      %p141 = scmp.ne.s32.totalorder %s126, %s140
      %p142 = scmp.eq.s32.totalorder %s27, 0
      %p143 = por %p141, %p142
      %s145 = sadd.s32 %s144, 1
      %p148 = scmp.eq.s32.totalorder %s21, 3
      %p149 = scmp.ne.s32.totalorder %s144, %s146
      %p150 = scmp.eq.s32.totalorder %s21, 0
      %p151 = por %p149, %p150
      %p152 = scmp.ne.s32.totalorder %s144, %s146
      %p153 = scmp.eq.s32.totalorder %s26, 3
      %p154 = por %p152, %p153
      %p155 = scmp.ne.s32.totalorder %s146, %s147
      %p156 = scmp.eq.s32.totalorder %s26, 0
      %p157 = por %p155, %p156
      %p158 = scmp.ne.s32.totalorder %s146, %s147
      %p159 = scmp.eq.s32.totalorder %s27, 3
      %p160 = por %p158, %p159
      %p162 = scmp.ne.s32.totalorder %s147, %s161
      %p163 = scmp.eq.s32.totalorder %s27, 0
      %p164 = por %p162, %p163
      %s166 = sadd.s32 %s165, 1
      %p169 = scmp.eq.s32.totalorder %s21, 3
      %p170 = scmp.ne.s32.totalorder %s165, %s167
      %p171 = scmp.eq.s32.totalorder %s21, 0
      %p172 = por %p170, %p171
      %p173 = scmp.ne.s32.totalorder %s165, %s167
      %p174 = scmp.eq.s32.totalorder %s26, 3
      %p175 = por %p173, %p174
      %p176 = scmp.ne.s32.totalorder %s167, %s168
      %p177 = scmp.eq.s32.totalorder %s26, 0
      %p178 = por %p176, %p177
      %p179 = scmp.ne.s32.totalorder %s167, %s168
      %p180 = scmp.eq.s32.totalorder %s27, 3
      %p181 = por %p179, %p180
      %p183 = scmp.ne.s32.totalorder %s168, %s182
      %p184 = scmp.eq.s32.totalorder %s27, 0
      %p185 = por %p183, %p184
      %s187 = sadd.s32 %s186, 1
      %p190 = scmp.eq.s32.totalorder %s21, 3
      %p191 = scmp.ne.s32.totalorder %s186, %s188
      %p192 = scmp.eq.s32.totalorder %s21, 0
      %p193 = por %p191, %p192
      %p194 = scmp.ne.s32.totalorder %s186, %s188
      %p195 = scmp.eq.s32.totalorder %s26, 3
      %p196 = por %p194, %p195
      %p197 = scmp.ne.s32.totalorder %s188, %s189
      %p198 = scmp.eq.s32.totalorder %s26, 0
      %p199 = por %p197, %p198
      %p200 = scmp.ne.s32.totalorder %s188, %s189
      %p201 = scmp.eq.s32.totalorder %s27, 3
      %p202 = por %p200, %p201
      %p204 = scmp.ne.s32.totalorder %s189, %s203
      %p205 = scmp.eq.s32.totalorder %s27, 0
      %p206 = por %p204, %p205
      %s208 = sadd.s32 %s207, 1
      %p211 = scmp.eq.s32.totalorder %s21, 3
      %p212 = scmp.ne.s32.totalorder %s207, %s209
      %p213 = scmp.eq.s32.totalorder %s21, 0
      %p214 = por %p212, %p213
      %p215 = scmp.ne.s32.totalorder %s207, %s209
      %p216 = scmp.eq.s32.totalorder %s26, 3
      %p217 = por %p215, %p216
      %p218 = scmp.ne.s32.totalorder %s209, %s210
      %p219 = scmp.eq.s32.totalorder %s26, 0
      %p220 = por %p218, %p219
      %p221 = scmp.ne.s32.totalorder %s209, %s210
      %p222 = scmp.eq.s32.totalorder %s27, 3
      %p223 = por %p221, %p222
      %p225 = scmp.ne.s32.totalorder %s210, %s224
      %p226 = scmp.eq.s32.totalorder %s27, 0
      %p227 = por %p225, %p226
      %s229 = sadd.s32 %s228, 1
      %p232 = scmp.eq.s32.totalorder %s21, 3
      %p233 = scmp.ne.s32.totalorder %s228, %s230
      %p234 = scmp.eq.s32.totalorder %s21, 0
      %p235 = por %p233, %p234
      %p236 = scmp.ne.s32.totalorder %s228, %s230
      %p237 = scmp.eq.s32.totalorder %s26, 3
      %p238 = por %p236, %p237
      %p239 = scmp.ne.s32.totalorder %s230, %s231
      %p240 = scmp.eq.s32.totalorder %s26, 0
      %p241 = por %p239, %p240
      %p242 = scmp.ne.s32.totalorder %s230, %s231
      %p243 = scmp.eq.s32.totalorder %s27, 3
      %p244 = por %p242, %p243
      %p246 = scmp.ne.s32.totalorder %s231, %s245
      %p247 = scmp.eq.s32.totalorder %s27, 0
      %p248 = por %p246, %p247
      %s250 = sadd.s32 %s249, 1
      %p253 = scmp.eq.s32.totalorder %s21, 3
      %p254 = scmp.ne.s32.totalorder %s249, %s251
      %p255 = scmp.eq.s32.totalorder %s21, 0
      %p256 = por %p254, %p255
      %p257 = scmp.ne.s32.totalorder %s249, %s251
      %p258 = scmp.eq.s32.totalorder %s26, 3
      %p259 = por %p257, %p258
      %p260 = scmp.ne.s32.totalorder %s251, %s252
      %p261 = scmp.eq.s32.totalorder %s26, 0
      %p262 = por %p260, %p261
      %p263 = scmp.ne.s32.totalorder %s251, %s252
      %p264 = scmp.eq.s32.totalorder %s27, 3
      %p265 = por %p263, %p264
      %p267 = scmp.ne.s32.totalorder %s252, %s266
      %p268 = scmp.eq.s32.totalorder %s27, 0
      %p269 = por %p267, %p268
      %s271 = sadd.s32 %s270, 1
      %p274 = scmp.eq.s32.totalorder %s21, 3
      %p275 = scmp.ne.s32.totalorder %s270, %s272
      %p276 = scmp.eq.s32.totalorder %s21, 0
      %p277 = por %p275, %p276
      %p278 = scmp.ne.s32.totalorder %s270, %s272
      %p279 = scmp.eq.s32.totalorder %s26, 3
      %p280 = por %p278, %p279
      %p281 = scmp.ne.s32.totalorder %s272, %s273
      %p282 = scmp.eq.s32.totalorder %s26, 0
      %p283 = por %p281, %p282
      %p284 = scmp.ne.s32.totalorder %s272, %s273
      %p285 = scmp.eq.s32.totalorder %s27, 3
      %p286 = por %p284, %p285
      %p288 = scmp.ne.s32.totalorder %s273, %s287
      %p289 = scmp.eq.s32.totalorder %s27, 0
      %p290 = por %p288, %p289
      %s291 = ssub.s32 %s21, %s28
      %p292 = scmp.eq.s32.totalorder %s291, 0
      %s294 = sadd.s32 %s293, 1
      %s295 = scalar_select %p292, %s293, %s294
      %p298 = pneg %p292
      %p299 = scmp.eq.s32.totalorder %s21, 3
      %p300 = por %p298, %p299
      %p301 = scmp.ne.s32.totalorder %s293, %s296
      %p302 = scmp.eq.s32.totalorder %s21, 0
      %p303 = por %p301, %p302
      %p304 = scmp.ne.s32.totalorder %s293, %s296
      %p305 = scmp.eq.s32.totalorder %s26, 3
      %p306 = por %p304, %p305
      %p307 = scmp.ne.s32.totalorder %s296, %s297
      %p308 = scmp.eq.s32.totalorder %s26, 0
      %p309 = por %p307, %p308
      %p310 = scmp.ne.s32.totalorder %s296, %s297
      %p311 = scmp.eq.s32.totalorder %s27, 3
      %p312 = por %p310, %p311
      %p314 = scmp.ne.s32.totalorder %s297, %s313
      %p315 = scmp.eq.s32.totalorder %s27, 0
      %p316 = por %p314, %p315
      %p317 = scmp.le.s32.totalorder 1, %s21
      %p318 = scmp.lt.s32.totalorder %s21, 5
      %p319 = pnand %p317, %p318
      %p320 = pneg %p319
      // Predicated region
      $region9: #{tpu_custom_call.1} parent=5 // pred_check
        _
      $region10: #{tpu_custom_call.1} parent=5 // pred_check_branch
        %322 = sbr.rel (%p319) target = $region12
      $region11: #{tpu_custom_call.1} parent=5 // pred_region
        %s323 = ssub.s32 %s21, 1
        // Predicated region
        $region13: #{tpu_custom_call.1} parent=11 // pred_check
          %p324 = pneg %p94
        $region14: #{tpu_custom_call.1} parent=11 // pred_check_branch
          %326 = sbr.rel (%p324) target = $region16
        $region15: #{tpu_custom_call.1} parent=11 // pred_region
          _
        $region16: #{tpu_custom_call.1} parent=11 // pred_fallthru
          _
        // Predicated region
        $region17: #{tpu_custom_call.1} parent=11 // pred_check
          %p327 = pneg %p115
        $region18: #{tpu_custom_call.1} parent=11 // pred_check_branch
          %329 = sbr.rel (%p327) target = $region20
        $region19: #{tpu_custom_call.1} parent=11 // pred_region
          _
        $region20: #{tpu_custom_call.1} parent=11 // pred_fallthru
          _
        // Predicated region
        $region21: #{tpu_custom_call.1} parent=11 // pred_check
          %p330 = pneg %p136
        $region22: #{tpu_custom_call.1} parent=11 // pred_check_branch
          %332 = sbr.rel (%p330) target = $region24
        $region23: #{tpu_custom_call.1} parent=11 // pred_region
          _
        $region24: #{tpu_custom_call.1} parent=11 // pred_fallthru
          _
        // Predicated region
        $region25: #{tpu_custom_call.1} parent=11 // pred_check
          %p333 = pneg %p157
        $region26: #{tpu_custom_call.1} parent=11 // pred_check_branch
          %335 = sbr.rel (%p333) target = $region28
        $region27: #{tpu_custom_call.1} parent=11 // pred_region
          _
        $region28: #{tpu_custom_call.1} parent=11 // pred_fallthru
          _
        // Predicated region
        $region29: #{tpu_custom_call.1} parent=11 // pred_check
          %p336 = pneg %p178
        $region30: #{tpu_custom_call.1} parent=11 // pred_check_branch
          %338 = sbr.rel (%p336) target = $region32
        $region31: #{tpu_custom_call.1} parent=11 // pred_region
          _
        $region32: #{tpu_custom_call.1} parent=11 // pred_fallthru
          _
        // Predicated region
        $region33: #{tpu_custom_call.1} parent=11 // pred_check
          %p339 = pneg %p199
        $region34: #{tpu_custom_call.1} parent=11 // pred_check_branch
          %341 = sbr.rel (%p339) target = $region36
        $region35: #{tpu_custom_call.1} parent=11 // pred_region
          _
        $region36: #{tpu_custom_call.1} parent=11 // pred_fallthru
          _
        // Predicated region
        $region37: #{tpu_custom_call.1} parent=11 // pred_check
          %p342 = pneg %p220
        $region38: #{tpu_custom_call.1} parent=11 // pred_check_branch
          %344 = sbr.rel (%p342) target = $region40
        $region39: #{tpu_custom_call.1} parent=11 // pred_region
          _
        $region40: #{tpu_custom_call.1} parent=11 // pred_fallthru
          _
        // Predicated region
        $region41: #{tpu_custom_call.1} parent=11 // pred_check
          %p345 = pneg %p241
        $region42: #{tpu_custom_call.1} parent=11 // pred_check_branch
          %347 = sbr.rel (%p345) target = $region44
        $region43: #{tpu_custom_call.1} parent=11 // pred_region
          _
        $region44: #{tpu_custom_call.1} parent=11 // pred_fallthru
          _
        // Predicated region
        $region45: #{tpu_custom_call.1} parent=11 // pred_check
          %p348 = pneg %p262
        $region46: #{tpu_custom_call.1} parent=11 // pred_check_branch
          %350 = sbr.rel (%p348) target = $region48
        $region47: #{tpu_custom_call.1} parent=11 // pred_region
          _
        $region48: #{tpu_custom_call.1} parent=11 // pred_fallthru
          _
        // Predicated region
        $region49: #{tpu_custom_call.1} parent=11 // pred_check
          %p351 = pneg %p283
        $region50: #{tpu_custom_call.1} parent=11 // pred_check_branch
          %353 = sbr.rel (%p351) target = $region52
        $region51: #{tpu_custom_call.1} parent=11 // pred_region
          _
        $region52: #{tpu_custom_call.1} parent=11 // pred_fallthru
          _
      $region12: #{tpu_custom_call.1} parent=5 // pred_fallthru
        _
      %p354 = scmp.lt.s32.totalorder %s21, 4
      // Predicated region
      $region53: #{tpu_custom_call.1} parent=5 // pred_check
        %p355 = pneg %p354
      $region54: #{tpu_custom_call.1} parent=5 // pred_check_branch
        %357 = sbr.rel (%p355) target = $region56
      $region55: #{tpu_custom_call.1} parent=5 // pred_region
        // Predicated region
        $region57: #{tpu_custom_call.1} parent=55 // pred_check
          %p358 = pneg %p41
        $region58: #{tpu_custom_call.1} parent=55 // pred_check_branch
          %360 = sbr.rel (%p358) target = $region60
        $region59: #{tpu_custom_call.1} parent=55 // pred_region
          %p361 = scmp.lt.s32.totalorder %s21, 3
          %s362 = scalar_select %p361, %s21, 3
          %s363 = smul.addr %s362, 2
          %s364 = smul.addr %s363, 8
          %s365 = scalar_lea.vmem %s0, %s364
        $region60: #{tpu_custom_call.1} parent=55 // pred_fallthru
          _
        // Predicated region
        $region61: #{tpu_custom_call.1} parent=55 // pred_check
          %p366 = pneg %p67
        $region62: #{tpu_custom_call.1} parent=55 // pred_check_branch
          %368 = sbr.rel (%p366) target = $region64
        $region63: #{tpu_custom_call.1} parent=55 // pred_region
          %p369 = scmp.lt.s32.totalorder %s21, 3
          %s370 = scalar_select %p369, %s21, 3
          %s371 = smul.addr %s370, 4
          %s372 = smul.addr %s371, 8
          %s373 = scalar_lea.vmem %s1, %s372
        $region64: #{tpu_custom_call.1} parent=55 // pred_fallthru
          _
      $region56: #{tpu_custom_call.1} parent=5 // pred_fallthru
        _
      %p374 = scmp.le.s32.totalorder 1, %s21
      %p375 = scmp.lt.s32.totalorder %s21, 5
      %p376 = pnand %p374, %p375
      %p377 = pneg %p376
      // Predicated region
      $region65: #{tpu_custom_call.1} parent=5 // pred_check
        _
      $region66: #{tpu_custom_call.1} parent=5 // pred_check_branch
        %379 = sbr.rel (%p376) target = $region68
      $region67: #{tpu_custom_call.1} parent=5 // pred_region
        %s380 = ssub.s32 %s21, 1
        %p381 = scmp.lt.s32.totalorder %s26, 3
        %s382 = scalar_select %p381, %s26, 3
        %s383 = smul.addr %s382, 2
        %s384 = smul.addr %s383, 8
        %s385 = scalar_lea.vmem %s0, %s384
        %p386 = pneg %p47
        %p387 = pneg %p44
        %p388 = scmp.lt.s32.totalorder %s26, 3
        %s389 = scalar_select %p388, %s26, 3
        %s390 = smul.addr %s389, 4
        %s391 = smul.addr %s390, 8
        %s392 = scalar_lea.vmem %s1, %s391
        %p393 = pneg %p73
        %p394 = pneg %p70
        %p395 = pneg %p94
        %p396 = pneg %p91
        %p397 = pneg %p115
        %p398 = pneg %p112
        %p399 = pneg %p136
        %p400 = pneg %p133
        %p401 = pneg %p157
        %p402 = pneg %p154
        %p403 = pneg %p178
        %p404 = pneg %p175
        %p405 = pneg %p199
        %p406 = pneg %p196
        %p407 = pneg %p220
        %p408 = pneg %p217
        %p409 = pneg %p241
        %p410 = pneg %p238
        %p411 = pneg %p262
        %p412 = pneg %p259
        %p413 = pneg %p283
        %p414 = pneg %p280
        %p415 = pneg %p309
        %p416 = pneg %p306
        %s417 = sand.u32 %s296, 1
        %s418 = scalar_lea.sflag [#allocation3], %s417
        %s419 = sand.u32 %s296, 1
        %s420 = scalar_lea.vmem [#allocation2], %s419
        %p421 = scmp.lt.s32.totalorder %s26, 3
        %s422 = scalar_select %p421, %s26, 3
        %s423 = smul.addr %s422, 2
        %s424 = smul.addr %s423, 8
        %s425 = scalar_lea.vmem %s0, %s424
        %p426 = scmp.lt.s32.totalorder %s26, 3
        %s427 = scalar_select %p426, %s26, 3
        %s428 = smul.addr %s427, 4
        %s429 = smul.addr %s428, 8
        %s430 = scalar_lea.vmem %s1, %s429
        %v431 = vld [vmem:[%s425] sm:$0xff]
        %v432 = vld [vmem:[%s425 + $0x8] sm:$0xff]
        %v433 = vld [vmem:[%s430] sm:$0xff]
        %v434 = vld [vmem:[%s430 + $0x8] sm:$0xff]
        %v435 = vld [vmem:[%s430 + $0x10] sm:$0xff]
        %v436 = vld [vmem:[%s430 + $0x18] sm:$0xff]
        %v437 = vld [vmem:[%s2] sm:$0xff]
        %v438 = vld [vmem:[%s2 + $0x8] sm:$0xff]
        %v439 = vld [vmem:[%s2 + $0x10] sm:$0xff]
        %v440 = vld [vmem:[%s2 + $0x18] sm:$0xff]
        %v441 = vld [vmem:[%s2 + $0x20] sm:$0xff]
        %v442 = vld [vmem:[%s2 + $0x28] sm:$0xff]
        %v443 = vld [vmem:[%s2 + $0x30] sm:$0xff]
        %v444 = vld [vmem:[%s2 + $0x38] sm:$0xff]
        %v445 = vld [vmem:[%s2 + $0x40] sm:$0xff]
        %v446 = vld [vmem:[%s2 + $0x48] sm:$0xff]
        %v447 = vld [vmem:[%s2 + $0x50] sm:$0xff]
        %v448 = vld [vmem:[%s2 + $0x58] sm:$0xff]
        %v449 = vld [vmem:[%s2 + $0x60] sm:$0xff]
        %v450 = vld [vmem:[%s2 + $0x68] sm:$0xff]
        %v451 = vld [vmem:[%s2 + $0x70] sm:$0xff]
        %v452 = vld [vmem:[%s2 + $0x78] sm:$0xff]
        %v453 = vld [vmem:[%s2 + $0x80] sm:$0xff]
        %v454 = vld [vmem:[%s2 + $0x88] sm:$0xff]
        %v455 = vld [vmem:[%s2 + $0x90] sm:$0xff]
        %v456 = vld [vmem:[%s2 + $0x98] sm:$0xff]
        %v457 = vld [vmem:[%s2 + $0xa0] sm:$0xff]
        %v458 = vld [vmem:[%s2 + $0xa8] sm:$0xff]
        %v459 = vld [vmem:[%s2 + $0xb0] sm:$0xff]
        %v460 = vld [vmem:[%s2 + $0xb8] sm:$0xff]
        %v461 = vld [vmem:[%s2 + $0xc0] sm:$0xff]
        %v462 = vld [vmem:[%s2 + $0xc8] sm:$0xff]
        %v463 = vld [vmem:[%s2 + $0xd0] sm:$0xff]
        %v464 = vld [vmem:[%s2 + $0xd8] sm:$0xff]
        %v465 = vld [vmem:[%s2 + $0xe0] sm:$0xff]
        %v466 = vld [vmem:[%s2 + $0xe8] sm:$0xff]
        %v467 = vld [vmem:[%s2 + $0xf0] sm:$0xff]
        %v468 = vld [vmem:[%s2 + $0xf8] sm:$0xff]
        %469 = vmatprep.subr.mxu0 0.0
        %470 = vmatpush1.msra.mxu0 %v452
        %471 = vmatprep.subr.mxu0 0.0
        %472 = vmatpush1.msra.mxu0 %v451
        %473 = vmatprep.subr.mxu0 0.0
        %474 = vmatpush1.msra.mxu0 %v450
        %475 = vmatprep.subr.mxu0 0.0
        %476 = vmatpush1.msra.mxu0 %v449
        %477 = vmatprep.subr.mxu0 0.0
        %478 = vmatpush1.msra.mxu0 %v448
        %479 = vmatprep.subr.mxu0 0.0
        %480 = vmatpush1.msra.mxu0 %v447
        %481 = vmatprep.subr.mxu0 0.0
        %482 = vmatpush1.msra.mxu0 %v446
        %483 = vmatprep.subr.mxu0 0.0
        %484 = vmatpush1.msra.mxu0 %v445
        %485 = vmatprep.subr.mxu0 0.0
        %486 = vmatpush1.msra.mxu0 %v444
        %487 = vmatprep.subr.mxu0 0.0
        %488 = vmatpush1.msra.mxu0 %v443
        %489 = vmatprep.subr.mxu0 0.0
        %490 = vmatpush1.msra.mxu0 %v442
        %491 = vmatprep.subr.mxu0 0.0
        %492 = vmatpush1.msra.mxu0 %v441
        %493 = vmatprep.subr.mxu0 0.0
        %494 = vmatpush1.msra.mxu0 %v440
        %495 = vmatprep.subr.mxu0 0.0
        %496 = vmatpush1.msra.mxu0 %v439
        %497 = vmatprep.subr.mxu0 0.0
        %498 = vmatpush1.msra.mxu0 %v438
        %499 = vmatprep.subr.mxu0 0.0
        %500 = vmatpush1.msra.mxu0 %v437
        %501 = vmatprep.subr.mxu0 0.0
        %502 = vmatpush2.msra.mxu0 %v468
        %503 = vmatprep.subr.mxu0 0.0
        %504 = vmatpush2.msra.mxu0 %v467
        %505 = vmatprep.subr.mxu0 0.0
        %506 = vmatpush2.msra.mxu0 %v466
        %507 = vmatprep.subr.mxu0 0.0
        %508 = vmatpush2.msra.mxu0 %v465
        %509 = vmatprep.subr.mxu0 0.0
        %510 = vmatpush2.msra.mxu0 %v464
        %511 = vmatprep.subr.mxu0 0.0
        %512 = vmatpush2.msra.mxu0 %v463
        %513 = vmatprep.subr.mxu0 0.0
        %514 = vmatpush2.msra.mxu0 %v462
        %515 = vmatprep.subr.mxu0 0.0
        %516 = vmatpush2.msra.mxu0 %v461
        %517 = vmatprep.subr.mxu0 0.0
        %518 = vmatpush2.msra.mxu0 %v460
        %519 = vmatprep.subr.mxu0 0.0
        %520 = vmatpush2.msra.mxu0 %v459
        %521 = vmatprep.subr.mxu0 0.0
        %522 = vmatpush2.msra.mxu0 %v458
        %523 = vmatprep.subr.mxu0 0.0
        %524 = vmatpush2.msra.mxu0 %v457
        %525 = vmatprep.subr.mxu0 0.0
        %526 = vmatpush2.msra.mxu0 %v456
        %527 = vmatprep.subr.mxu0 0.0
        %528 = vmatpush2.msra.mxu0 %v455
        %529 = vmatprep.subr.mxu0 0.0
        %530 = vmatpush2.msra.mxu0 %v454
        %531 = vmatprep.subr.mxu0 0.0
        %532 = vmatpush2.msra.mxu0 %v453
        %533 = vmatprep.mubr.f32.mxu0 %v434
        %534 = vmatmul.mubr.f32.gmra.mxu0 %v433
        %v535 = vpop.f32.mrf.mxu0
        %v536 = vadd.f32 0.0, %v535
        %v537 = vpop.f32.mrf.mxu0
        %538 = vmatprep.mubr.f32.mxu0 %v436
        %539 = vmatmul.mubr.f32.gmra.mxu0 %v435
        %v540 = vpop.f32.mrf.mxu0
        %v541 = vadd.f32 0.0, %v540
        %v542 = vpop.f32.mrf.mxu0
        %543 = vdwg.mxu0
        %v544 = vld [vmem:[%s3] sm:$0x1]
        %v546 = vlaneseq
        %v547 = vshrl.u32 %v546, 7
        %v548 = vsub.s32 0, %v547
        %v549 = vrot.slane %v544, %v548
        %vm551 = vcmask 130048
        %v553 = vsel %vm551, %v431, 0
        %v556 = vsel %vm551, %v432, 0
        %558 = vmatprep.subr.mxu0 0.0
        %559 = vmatpush1.msra.mxu0 0.0
        %560 = vmatprep.subr.mxu0 0.0
        %561 = vmatpush1.msra.mxu0 0.0
        %562 = vmatprep.subr.mxu0 0.0
        %563 = vmatpush1.msra.mxu0 0.0
        %564 = vmatprep.subr.mxu0 0.0
        %565 = vmatpush1.msra.mxu0 0.0
        %566 = vmatprep.subr.mxu0 0.0
        %567 = vmatpush1.msra.mxu0 0.0
        %568 = vmatprep.subr.mxu0 0.0
        %569 = vmatpush1.msra.mxu0 0.0
        %570 = vmatprep.subr.mxu0 0.0
        %571 = vmatpush1.msra.mxu0 0.0
        %572 = vmatprep.subr.mxu0 0.0
        %573 = vmatpush1.msra.mxu0 0.0
        %574 = vmatprep.subr.mxu0 0.0
        %575 = vmatpush1.msra.mxu0 0.0
        %576 = vmatprep.subr.mxu0 0.0
        %577 = vmatpush1.msra.mxu0 0.0
        %578 = vmatprep.subr.mxu0 0.0
        %579 = vmatpush1.msra.mxu0 0.0
        %580 = vmatprep.subr.mxu0 0.0
        %581 = vmatpush1.msra.mxu0 0.0
        %582 = vmatprep.subr.mxu0 0.0
        %583 = vmatpush1.msra.mxu0 0.0
        %584 = vmatprep.subr.mxu0 0.0
        %585 = vmatpush1.msra.mxu0 0.0
        %586 = vmatprep.subr.mxu0 0.0
        %587 = vmatpush1.msra.mxu0 %v541
        %588 = vmatprep.subr.mxu0 0.0
        %589 = vmatpush1.msra.mxu0 %v536
        %590 = vmatprep.subr.mxu0 0.0
        %591 = vmatpush2.msra.mxu0 0.0
        %592 = vmatprep.subr.mxu0 0.0
        %593 = vmatpush2.msra.mxu0 0.0
        %594 = vmatprep.subr.mxu0 0.0
        %595 = vmatpush2.msra.mxu0 0.0
        %596 = vmatprep.subr.mxu0 0.0
        %597 = vmatpush2.msra.mxu0 0.0
        %598 = vmatprep.subr.mxu0 0.0
        %599 = vmatpush2.msra.mxu0 0.0
        %600 = vmatprep.subr.mxu0 0.0
        %601 = vmatpush2.msra.mxu0 0.0
        %602 = vmatprep.subr.mxu0 0.0
        %603 = vmatpush2.msra.mxu0 0.0
        %604 = vmatprep.subr.mxu0 0.0
        %605 = vmatpush2.msra.mxu0 0.0
        %606 = vmatprep.subr.mxu0 0.0
        %607 = vmatpush2.msra.mxu0 0.0
        %608 = vmatprep.subr.mxu0 0.0
        %609 = vmatpush2.msra.mxu0 0.0
        %610 = vmatprep.subr.mxu0 0.0
        %611 = vmatpush2.msra.mxu0 0.0
        %612 = vmatprep.subr.mxu0 0.0
        %613 = vmatpush2.msra.mxu0 0.0
        %614 = vmatprep.subr.mxu0 0.0
        %615 = vmatpush2.msra.mxu0 0.0
        %616 = vmatprep.subr.mxu0 0.0
        %617 = vmatpush2.msra.mxu0 0.0
        %618 = vmatprep.subr.mxu0 0.0
        %619 = vmatpush2.msra.mxu0 0.0
        %620 = vmatprep.subr.mxu0 0.0
        %621 = vmatpush2.msra.mxu0 0.0
        %622 = vmatprep.mubr.f32.mxu0 0.0
        %623 = vmatmul.mubr.f32.gmra.mxu0 %v553
        %v624 = vpop.f32.mrf.mxu0
        %v625 = vadd.f32 %v549, %v624
        %v626 = vpop.f32.mrf.mxu0
        %627 = vmatprep.mubr.f32.mxu0 0.0
        %628 = vmatmul.mubr.f32.gmra.mxu0 %v556
        %v629 = vpop.f32.mrf.mxu0
        %v630 = vadd.f32 %v549, %v629
        %v631 = vpop.f32.mrf.mxu0
        %632 = vdwg.mxu0
        %v633 = vmax.f32 %v625, 0.0
        %v634 = vmax.f32 %v630, 0.0
        %v635 = vld [vmem:[%s4] sm:$0xff]
        %v636 = vld [vmem:[%s4 + $0x8] sm:$0xff]
        %v637 = vld [vmem:[%s4 + $0x10] sm:$0xff]
        %v638 = vld [vmem:[%s4 + $0x18] sm:$0xff]
        %vm639 = vcmask 261120
        %v641 = vsel %vm639, %v633, 0
        %v644 = vsel %vm639, %v634, 0
        %646 = vmatprep.subr.mxu0 0.0
        %647 = vmatpush1.msra.mxu0 0.0
        %648 = vmatprep.subr.mxu0 0.0
        %649 = vmatpush1.msra.mxu0 0.0
        %650 = vmatprep.subr.mxu0 0.0
        %651 = vmatpush1.msra.mxu0 0.0
        %652 = vmatprep.subr.mxu0 0.0
        %653 = vmatpush1.msra.mxu0 0.0
        %654 = vmatprep.subr.mxu0 0.0
        %655 = vmatpush1.msra.mxu0 0.0
        %656 = vmatprep.subr.mxu0 0.0
        %657 = vmatpush1.msra.mxu0 0.0
        %658 = vmatprep.subr.mxu0 0.0
        %659 = vmatpush1.msra.mxu0 0.0
        %660 = vmatprep.subr.mxu0 0.0
        %661 = vmatpush1.msra.mxu0 0.0
        %662 = vmatprep.subr.mxu0 0.0
        %663 = vmatpush1.msra.mxu0 0.0
        %664 = vmatprep.subr.mxu0 0.0
        %665 = vmatpush1.msra.mxu0 0.0
        %666 = vmatprep.subr.mxu0 0.0
        %667 = vmatpush1.msra.mxu0 0.0
        %668 = vmatprep.subr.mxu0 0.0
        %669 = vmatpush1.msra.mxu0 0.0
        %670 = vmatprep.subr.mxu0 0.0
        %671 = vmatpush1.msra.mxu0 %v638
        %672 = vmatprep.subr.mxu0 0.0
        %673 = vmatpush1.msra.mxu0 %v637
        %674 = vmatprep.subr.mxu0 0.0
        %675 = vmatpush1.msra.mxu0 %v636
        %676 = vmatprep.subr.mxu0 0.0
        %677 = vmatpush1.msra.mxu0 %v635
        %678 = vmatprep.subr.mxu0 0.0
        %679 = vmatpush2.msra.mxu0 0.0
        %680 = vmatprep.subr.mxu0 0.0
        %681 = vmatpush2.msra.mxu0 0.0
        %682 = vmatprep.subr.mxu0 0.0
        %683 = vmatpush2.msra.mxu0 0.0
        %684 = vmatprep.subr.mxu0 0.0
        %685 = vmatpush2.msra.mxu0 0.0
        %686 = vmatprep.subr.mxu0 0.0
        %687 = vmatpush2.msra.mxu0 0.0
        %688 = vmatprep.subr.mxu0 0.0
        %689 = vmatpush2.msra.mxu0 0.0
        %690 = vmatprep.subr.mxu0 0.0
        %691 = vmatpush2.msra.mxu0 0.0
        %692 = vmatprep.subr.mxu0 0.0
        %693 = vmatpush2.msra.mxu0 0.0
        %694 = vmatprep.subr.mxu0 0.0
        %695 = vmatpush2.msra.mxu0 0.0
        %696 = vmatprep.subr.mxu0 0.0
        %697 = vmatpush2.msra.mxu0 0.0
        %698 = vmatprep.subr.mxu0 0.0
        %699 = vmatpush2.msra.mxu0 0.0
        %700 = vmatprep.subr.mxu0 0.0
        %701 = vmatpush2.msra.mxu0 0.0
        %702 = vmatprep.subr.mxu0 0.0
        %703 = vmatpush2.msra.mxu0 0.0
        %704 = vmatprep.subr.mxu0 0.0
        %705 = vmatpush2.msra.mxu0 0.0
        %706 = vmatprep.subr.mxu0 0.0
        %707 = vmatpush2.msra.mxu0 0.0
        %708 = vmatprep.subr.mxu0 0.0
        %709 = vmatpush2.msra.mxu0 0.0
        %710 = vmatprep.mubr.f32.mxu0 0.0
        %711 = vmatmul.mubr.f32.gmra.mxu0 %v641
        %v712 = vpop.f32.mrf.mxu0
        %v713 = vadd.f32 0.0, %v712
        %v714 = vpop.f32.mrf.mxu0
        %715 = vmatprep.mubr.f32.mxu0 0.0
        %716 = vmatmul.mubr.f32.gmra.mxu0 %v644
        %v717 = vpop.f32.mrf.mxu0
        %v718 = vadd.f32 0.0, %v717
        %v719 = vpop.f32.mrf.mxu0
        %720 = vdwg.mxu0
        %v721 = vld [vmem:[%s5] sm:$0x1]
        %v723 = vlaneseq
        %v724 = vshrl.u32 %v723, 7
        %v725 = vsub.s32 0, %v724
        %v726 = vrot.slane %v721, %v725
        %728 = vmatprep.subr.mxu0 0.0
        %729 = vmatpush1.msra.mxu0 0.0
        %730 = vmatprep.subr.mxu0 0.0
        %731 = vmatpush1.msra.mxu0 0.0
        %732 = vmatprep.subr.mxu0 0.0
        %733 = vmatpush1.msra.mxu0 0.0
        %734 = vmatprep.subr.mxu0 0.0
        %735 = vmatpush1.msra.mxu0 0.0
        %736 = vmatprep.subr.mxu0 0.0
        %737 = vmatpush1.msra.mxu0 0.0
        %738 = vmatprep.subr.mxu0 0.0
        %739 = vmatpush1.msra.mxu0 0.0
        %740 = vmatprep.subr.mxu0 0.0
        %741 = vmatpush1.msra.mxu0 0.0
        %742 = vmatprep.subr.mxu0 0.0
        %743 = vmatpush1.msra.mxu0 0.0
        %744 = vmatprep.subr.mxu0 0.0
        %745 = vmatpush1.msra.mxu0 0.0
        %746 = vmatprep.subr.mxu0 0.0
        %747 = vmatpush1.msra.mxu0 0.0
        %748 = vmatprep.subr.mxu0 0.0
        %749 = vmatpush1.msra.mxu0 0.0
        %750 = vmatprep.subr.mxu0 0.0
        %751 = vmatpush1.msra.mxu0 0.0
        %752 = vmatprep.subr.mxu0 0.0
        %753 = vmatpush1.msra.mxu0 0.0
        %754 = vmatprep.subr.mxu0 0.0
        %755 = vmatpush1.msra.mxu0 0.0
        %756 = vmatprep.subr.mxu0 0.0
        %757 = vmatpush1.msra.mxu0 %v718
        %758 = vmatprep.subr.mxu0 0.0
        %759 = vmatpush1.msra.mxu0 %v713
        %760 = vmatprep.subr.mxu0 0.0
        %761 = vmatpush2.msra.mxu0 0.0
        %762 = vmatprep.subr.mxu0 0.0
        %763 = vmatpush2.msra.mxu0 0.0
        %764 = vmatprep.subr.mxu0 0.0
        %765 = vmatpush2.msra.mxu0 0.0
        %766 = vmatprep.subr.mxu0 0.0
        %767 = vmatpush2.msra.mxu0 0.0
        %768 = vmatprep.subr.mxu0 0.0
        %769 = vmatpush2.msra.mxu0 0.0
        %770 = vmatprep.subr.mxu0 0.0
        %771 = vmatpush2.msra.mxu0 0.0
        %772 = vmatprep.subr.mxu0 0.0
        %773 = vmatpush2.msra.mxu0 0.0
        %774 = vmatprep.subr.mxu0 0.0
        %775 = vmatpush2.msra.mxu0 0.0
        %776 = vmatprep.subr.mxu0 0.0
        %777 = vmatpush2.msra.mxu0 0.0
        %778 = vmatprep.subr.mxu0 0.0
        %779 = vmatpush2.msra.mxu0 0.0
        %780 = vmatprep.subr.mxu0 0.0
        %781 = vmatpush2.msra.mxu0 0.0
        %782 = vmatprep.subr.mxu0 0.0
        %783 = vmatpush2.msra.mxu0 0.0
        %784 = vmatprep.subr.mxu0 0.0
        %785 = vmatpush2.msra.mxu0 0.0
        %786 = vmatprep.subr.mxu0 0.0
        %787 = vmatpush2.msra.mxu0 0.0
        %788 = vmatprep.subr.mxu0 0.0
        %789 = vmatpush2.msra.mxu0 0.0
        %790 = vmatprep.subr.mxu0 0.0
        %791 = vmatpush2.msra.mxu0 0.0
        %792 = vmatprep.mubr.f32.mxu0 0.0
        %793 = vmatmul.mubr.f32.gmra.mxu0 %v553
        %v794 = vpop.f32.mrf.mxu0
        %v795 = vadd.f32 %v726, %v794
        %v796 = vpop.f32.mrf.mxu0
        %797 = vmatprep.mubr.f32.mxu0 0.0
        %798 = vmatmul.mubr.f32.gmra.mxu0 %v556
        %v799 = vpop.f32.mrf.mxu0
        %v800 = vadd.f32 %v726, %v799
        %v801 = vpop.f32.mrf.mxu0
        %802 = vdwg.mxu0
        %v803 = vmax.f32 %v795, 0.0
        %v804 = vmax.f32 %v800, 0.0
        %v805 = vld [vmem:[%s6] sm:$0xff]
        %v806 = vld [vmem:[%s6 + $0x8] sm:$0xff]
        %v807 = vld [vmem:[%s6 + $0x10] sm:$0xff]
        %v808 = vld [vmem:[%s6 + $0x18] sm:$0xff]
        %v810 = vsel %vm639, %v803, 0
        %v813 = vsel %vm639, %v804, 0
        %815 = vmatprep.subr.mxu0 0.0
        %816 = vmatpush1.msra.mxu0 0.0
        %817 = vmatprep.subr.mxu0 0.0
        %818 = vmatpush1.msra.mxu0 0.0
        %819 = vmatprep.subr.mxu0 0.0
        %820 = vmatpush1.msra.mxu0 0.0
        %821 = vmatprep.subr.mxu0 0.0
        %822 = vmatpush1.msra.mxu0 0.0
        %823 = vmatprep.subr.mxu0 0.0
        %824 = vmatpush1.msra.mxu0 0.0
        %825 = vmatprep.subr.mxu0 0.0
        %826 = vmatpush1.msra.mxu0 0.0
        %827 = vmatprep.subr.mxu0 0.0
        %828 = vmatpush1.msra.mxu0 0.0
        %829 = vmatprep.subr.mxu0 0.0
        %830 = vmatpush1.msra.mxu0 0.0
        %831 = vmatprep.subr.mxu0 0.0
        %832 = vmatpush1.msra.mxu0 0.0
        %833 = vmatprep.subr.mxu0 0.0
        %834 = vmatpush1.msra.mxu0 0.0
        %835 = vmatprep.subr.mxu0 0.0
        %836 = vmatpush1.msra.mxu0 0.0
        %837 = vmatprep.subr.mxu0 0.0
        %838 = vmatpush1.msra.mxu0 0.0
        %839 = vmatprep.subr.mxu0 0.0
        %840 = vmatpush1.msra.mxu0 %v808
        %841 = vmatprep.subr.mxu0 0.0
        %842 = vmatpush1.msra.mxu0 %v807
        %843 = vmatprep.subr.mxu0 0.0
        %844 = vmatpush1.msra.mxu0 %v806
        %845 = vmatprep.subr.mxu0 0.0
        %846 = vmatpush1.msra.mxu0 %v805
        %847 = vmatprep.subr.mxu0 0.0
        %848 = vmatpush2.msra.mxu0 0.0
        %849 = vmatprep.subr.mxu0 0.0
        %850 = vmatpush2.msra.mxu0 0.0
        %851 = vmatprep.subr.mxu0 0.0
        %852 = vmatpush2.msra.mxu0 0.0
        %853 = vmatprep.subr.mxu0 0.0
        %854 = vmatpush2.msra.mxu0 0.0
        %855 = vmatprep.subr.mxu0 0.0
        %856 = vmatpush2.msra.mxu0 0.0
        %857 = vmatprep.subr.mxu0 0.0
        %858 = vmatpush2.msra.mxu0 0.0
        %859 = vmatprep.subr.mxu0 0.0
        %860 = vmatpush2.msra.mxu0 0.0
        %861 = vmatprep.subr.mxu0 0.0
        %862 = vmatpush2.msra.mxu0 0.0
        %863 = vmatprep.subr.mxu0 0.0
        %864 = vmatpush2.msra.mxu0 0.0
        %865 = vmatprep.subr.mxu0 0.0
        %866 = vmatpush2.msra.mxu0 0.0
        %867 = vmatprep.subr.mxu0 0.0
        %868 = vmatpush2.msra.mxu0 0.0
        %869 = vmatprep.subr.mxu0 0.0
        %870 = vmatpush2.msra.mxu0 0.0
        %871 = vmatprep.subr.mxu0 0.0
        %872 = vmatpush2.msra.mxu0 0.0
        %873 = vmatprep.subr.mxu0 0.0
        %874 = vmatpush2.msra.mxu0 0.0
        %875 = vmatprep.subr.mxu0 0.0
        %876 = vmatpush2.msra.mxu0 0.0
        %877 = vmatprep.subr.mxu0 0.0
        %878 = vmatpush2.msra.mxu0 0.0
        %879 = vmatprep.mubr.f32.mxu0 0.0
        %880 = vmatmul.mubr.f32.gmra.mxu0 %v810
        %v881 = vpop.f32.mrf.mxu0
        %v882 = vadd.f32 0.0, %v881
        %v883 = vpop.f32.mrf.mxu0
        %884 = vmatprep.mubr.f32.mxu0 0.0
        %885 = vmatmul.mubr.f32.gmra.mxu0 %v813
        %v886 = vpop.f32.mrf.mxu0
        %v887 = vadd.f32 0.0, %v886
        %v888 = vpop.f32.mrf.mxu0
        %889 = vdwg.mxu0
        %v890 = vld [vmem:[%s7] sm:$0x1]
        %v892 = vlaneseq
        %v893 = vshrl.u32 %v892, 7
        %v894 = vsub.s32 0, %v893
        %v895 = vrot.slane %v890, %v894
        %897 = vmatprep.subr.mxu0 0.0
        %898 = vmatpush1.msra.mxu0 0.0
        %899 = vmatprep.subr.mxu0 0.0
        %900 = vmatpush1.msra.mxu0 0.0
        %901 = vmatprep.subr.mxu0 0.0
        %902 = vmatpush1.msra.mxu0 0.0
        %903 = vmatprep.subr.mxu0 0.0
        %904 = vmatpush1.msra.mxu0 0.0
        %905 = vmatprep.subr.mxu0 0.0
        %906 = vmatpush1.msra.mxu0 0.0
        %907 = vmatprep.subr.mxu0 0.0
        %908 = vmatpush1.msra.mxu0 0.0
        %909 = vmatprep.subr.mxu0 0.0
        %910 = vmatpush1.msra.mxu0 0.0
        %911 = vmatprep.subr.mxu0 0.0
        %912 = vmatpush1.msra.mxu0 0.0
        %913 = vmatprep.subr.mxu0 0.0
        %914 = vmatpush1.msra.mxu0 0.0
        %915 = vmatprep.subr.mxu0 0.0
        %916 = vmatpush1.msra.mxu0 0.0
        %917 = vmatprep.subr.mxu0 0.0
        %918 = vmatpush1.msra.mxu0 0.0
        %919 = vmatprep.subr.mxu0 0.0
        %920 = vmatpush1.msra.mxu0 0.0
        %921 = vmatprep.subr.mxu0 0.0
        %922 = vmatpush1.msra.mxu0 0.0
        %923 = vmatprep.subr.mxu0 0.0
        %924 = vmatpush1.msra.mxu0 0.0
        %925 = vmatprep.subr.mxu0 0.0
        %926 = vmatpush1.msra.mxu0 %v887
        %927 = vmatprep.subr.mxu0 0.0
        %928 = vmatpush1.msra.mxu0 %v882
        %929 = vmatprep.subr.mxu0 0.0
        %930 = vmatpush2.msra.mxu0 0.0
        %931 = vmatprep.subr.mxu0 0.0
        %932 = vmatpush2.msra.mxu0 0.0
        %933 = vmatprep.subr.mxu0 0.0
        %934 = vmatpush2.msra.mxu0 0.0
        %935 = vmatprep.subr.mxu0 0.0
        %936 = vmatpush2.msra.mxu0 0.0
        %937 = vmatprep.subr.mxu0 0.0
        %938 = vmatpush2.msra.mxu0 0.0
        %939 = vmatprep.subr.mxu0 0.0
        %940 = vmatpush2.msra.mxu0 0.0
        %941 = vmatprep.subr.mxu0 0.0
        %942 = vmatpush2.msra.mxu0 0.0
        %943 = vmatprep.subr.mxu0 0.0
        %944 = vmatpush2.msra.mxu0 0.0
        %945 = vmatprep.subr.mxu0 0.0
        %946 = vmatpush2.msra.mxu0 0.0
        %947 = vmatprep.subr.mxu0 0.0
        %948 = vmatpush2.msra.mxu0 0.0
        %949 = vmatprep.subr.mxu0 0.0
        %950 = vmatpush2.msra.mxu0 0.0
        %951 = vmatprep.subr.mxu0 0.0
        %952 = vmatpush2.msra.mxu0 0.0
        %953 = vmatprep.subr.mxu0 0.0
        %954 = vmatpush2.msra.mxu0 0.0
        %955 = vmatprep.subr.mxu0 0.0
        %956 = vmatpush2.msra.mxu0 0.0
        %957 = vmatprep.subr.mxu0 0.0
        %958 = vmatpush2.msra.mxu0 0.0
        %959 = vmatprep.subr.mxu0 0.0
        %960 = vmatpush2.msra.mxu0 0.0
        %961 = vmatprep.mubr.f32.mxu0 0.0
        %962 = vmatmul.mubr.f32.gmra.mxu0 %v553
        %v963 = vpop.f32.mrf.mxu0
        %v964 = vadd.f32 %v895, %v963
        %v965 = vpop.f32.mrf.mxu0
        %966 = vmatprep.mubr.f32.mxu0 0.0
        %967 = vmatmul.mubr.f32.gmra.mxu0 %v556
        %v968 = vpop.f32.mrf.mxu0
        %v969 = vadd.f32 %v895, %v968
        %v970 = vpop.f32.mrf.mxu0
        %971 = vdwg.mxu0
        %vm972 = vcmask 7168
        %v973 = vsel %vm972, %v964, -inf
        %v974 = vsel %vm972, %v969, -inf
        %v975 = vmax.f32 %v973, %v974
        %v976 = vrot.slane %v975, 4
        %v977 = vmax.f32 %v975, %v976
        %v978 = vrot.slane %v977, 2
        %v979 = vmax.f32 %v977, %v978
        %v980 = vrot.slane %v979, 1
        %v981 = vmax.f32 %v979, %v980
        %v982 = vsub.f32 %v964, %v981
        %v983 = vsub.f32 %v969, %v981
        %v984 = vmul.f32 %v982, 1.442695
        %v985 = vpow.pop %v984
        %v986 = vmul.f32 %v983, 1.442695
        %v987 = vpow.pop %v986
        %989 = vset.pattern.permute.xlu0 0
        %990 = vperm.xlu0 %989, %v985
        %v991 = vpop.permute.xlu0 %990
        %994 = vset.pattern.permute.xlu0 0
        %995 = vperm.xlu0 %994, %v987
        %v996 = vpop.permute.xlu0 %995
        %v998 = vmul.f32 %v991, %v964
        %v999 = vmul.f32 %v996, %v969
        %vm1000 = vcmask 277504
        %v1001 = vsel %vm1000, %v998, 0.0
        %v1002 = vsel %vm1000, %v999, 0.0
        %v1003 = vadd.f32 %v1001, %v1002
        %v1004 = vrot.slane %v1003, 4
        %v1005 = vadd.f32 %v1003, %v1004
        %v1006 = vrot.slane %v1005, 2
        %v1007 = vadd.f32 %v1005, %v1006
        %v1008 = vrot.slane %v1007, 1
        %v1009 = vadd.f32 %v1007, %v1008
        %v1010 = vrcp.pop %v1009
        %1012 = vset.pattern.permute.xlu0 1
        %1013 = vperm.xlu0 %1012, %v1010
        %v1014 = vpop.permute.xlu0 %1013
        %v1016 = vmul.f32 %v1009, %v1014
        %v1017 = vld [vmem:[%s8] sm:$0xff]
        %v1018 = vld [vmem:[%s8 + $0x8] sm:$0xff]
        %v1019 = vld [vmem:[%s8 + $0x10] sm:$0xff]
        %v1020 = vld [vmem:[%s8 + $0x18] sm:$0xff]
        %v1021 = vld [vmem:[%s8 + $0x20] sm:$0x3]
        %v1022 = vld [vmem:[%s9] sm:$0x1]
        %v1024 = vsel %vm1000, %v1016, 0
        %vm1026 = vcmask 1041408
        %v1028 = vsel %vm1026, %v1021, 0
        %1030 = vmatprep.subr.mxu0 0.0
        %1031 = vmatpush1.msra.mxu0 0.0
        %1032 = vmatprep.subr.mxu0 0.0
        %1033 = vmatpush1.msra.mxu0 0.0
        %1034 = vmatprep.subr.mxu0 0.0
        %1035 = vmatpush1.msra.mxu0 0.0
        %1036 = vmatprep.subr.mxu0 0.0
        %1037 = vmatpush1.msra.mxu0 0.0
        %1038 = vmatprep.subr.mxu0 0.0
        %1039 = vmatpush1.msra.mxu0 0.0
        %1040 = vmatprep.subr.mxu0 0.0
        %1041 = vmatpush1.msra.mxu0 0.0
        %1042 = vmatprep.subr.mxu0 0.0
        %1043 = vmatpush1.msra.mxu0 0.0
        %1044 = vmatprep.subr.mxu0 0.0
        %1045 = vmatpush1.msra.mxu0 0.0
        %1046 = vmatprep.subr.mxu0 0.0
        %1047 = vmatpush1.msra.mxu0 0.0
        %1048 = vmatprep.subr.mxu0 0.0
        %1049 = vmatpush1.msra.mxu0 0.0
        %1050 = vmatprep.subr.mxu0 0.0
        %1051 = vmatpush1.msra.mxu0 0.0
        %1052 = vmatprep.subr.mxu0 0.0
        %1053 = vmatpush1.msra.mxu0 %v1028
        %1054 = vmatprep.subr.mxu0 0.0
        %1055 = vmatpush1.msra.mxu0 %v1020
        %1056 = vmatprep.subr.mxu0 0.0
        %1057 = vmatpush1.msra.mxu0 %v1019
        %1058 = vmatprep.subr.mxu0 0.0
        %1059 = vmatpush1.msra.mxu0 %v1018
        %1060 = vmatprep.subr.mxu0 0.0
        %1061 = vmatpush1.msra.mxu0 %v1017
        %1062 = vmatprep.subr.mxu0 0.0
        %1063 = vmatpush2.msra.mxu0 0.0
        %1064 = vmatprep.subr.mxu0 0.0
        %1065 = vmatpush2.msra.mxu0 0.0
        %1066 = vmatprep.subr.mxu0 0.0
        %1067 = vmatpush2.msra.mxu0 0.0
        %1068 = vmatprep.subr.mxu0 0.0
        %1069 = vmatpush2.msra.mxu0 0.0
        %1070 = vmatprep.subr.mxu0 0.0
        %1071 = vmatpush2.msra.mxu0 0.0
        %1072 = vmatprep.subr.mxu0 0.0
        %1073 = vmatpush2.msra.mxu0 0.0
        %1074 = vmatprep.subr.mxu0 0.0
        %1075 = vmatpush2.msra.mxu0 0.0
        %1076 = vmatprep.subr.mxu0 0.0
        %1077 = vmatpush2.msra.mxu0 0.0
        %1078 = vmatprep.subr.mxu0 0.0
        %1079 = vmatpush2.msra.mxu0 0.0
        %1080 = vmatprep.subr.mxu0 0.0
        %1081 = vmatpush2.msra.mxu0 0.0
        %1082 = vmatprep.subr.mxu0 0.0
        %1083 = vmatpush2.msra.mxu0 0.0
        %1084 = vmatprep.subr.mxu0 0.0
        %1085 = vmatpush2.msra.mxu0 0.0
        %1086 = vmatprep.subr.mxu0 0.0
        %1087 = vmatpush2.msra.mxu0 0.0
        %1088 = vmatprep.subr.mxu0 0.0
        %1089 = vmatpush2.msra.mxu0 0.0
        %1090 = vmatprep.subr.mxu0 0.0
        %1091 = vmatpush2.msra.mxu0 0.0
        %1092 = vmatprep.subr.mxu0 0.0
        %1093 = vmatpush2.msra.mxu0 0.0
        %1094 = vmatprep.mubr.f32.mxu0 0.0
        %1095 = vmatmul.mubr.f32.gmra.mxu0 %v1024
        %v1096 = vpop.f32.mrf.mxu0
        %v1097 = vadd.f32 %v1022, %v1096
        %v1098 = vpop.f32.mrf.mxu0
        %1099 = vdwg.mxu0
        %v1100 = vmax.f32 %v1097, 0.0
        %v1101 = vld [vmem:[%s10] sm:$0xff]
        %v1102 = vld [vmem:[%s10 + $0x8] sm:$0xff]
        %v1103 = vld [vmem:[%s10 + $0x10] sm:$0xff]
        %v1104 = vld [vmem:[%s10 + $0x18] sm:$0xff]
        %v1105 = vld [vmem:[%s11] sm:$0x1]
        %v1107 = vsel %vm639, %v1100, 0
        %1109 = vmatprep.subr.mxu0 0.0
        %1110 = vmatpush1.msra.mxu0 0.0
        %1111 = vmatprep.subr.mxu0 0.0
        %1112 = vmatpush1.msra.mxu0 0.0
        %1113 = vmatprep.subr.mxu0 0.0
        %1114 = vmatpush1.msra.mxu0 0.0
        %1115 = vmatprep.subr.mxu0 0.0
        %1116 = vmatpush1.msra.mxu0 0.0
        %1117 = vmatprep.subr.mxu0 0.0
        %1118 = vmatpush1.msra.mxu0 0.0
        %1119 = vmatprep.subr.mxu0 0.0
        %1120 = vmatpush1.msra.mxu0 0.0
        %1121 = vmatprep.subr.mxu0 0.0
        %1122 = vmatpush1.msra.mxu0 0.0
        %1123 = vmatprep.subr.mxu0 0.0
        %1124 = vmatpush1.msra.mxu0 0.0
        %1125 = vmatprep.subr.mxu0 0.0
        %1126 = vmatpush1.msra.mxu0 0.0
        %1127 = vmatprep.subr.mxu0 0.0
        %1128 = vmatpush1.msra.mxu0 0.0
        %1129 = vmatprep.subr.mxu0 0.0
        %1130 = vmatpush1.msra.mxu0 0.0
        %1131 = vmatprep.subr.mxu0 0.0
        %1132 = vmatpush1.msra.mxu0 0.0
        %1133 = vmatprep.subr.mxu0 0.0
        %1134 = vmatpush1.msra.mxu0 %v1104
        %1135 = vmatprep.subr.mxu0 0.0
        %1136 = vmatpush1.msra.mxu0 %v1103
        %1137 = vmatprep.subr.mxu0 0.0
        %1138 = vmatpush1.msra.mxu0 %v1102
        %1139 = vmatprep.subr.mxu0 0.0
        %1140 = vmatpush1.msra.mxu0 %v1101
        %1141 = vmatprep.subr.mxu0 0.0
        %1142 = vmatpush2.msra.mxu0 0.0
        %1143 = vmatprep.subr.mxu0 0.0
        %1144 = vmatpush2.msra.mxu0 0.0
        %1145 = vmatprep.subr.mxu0 0.0
        %1146 = vmatpush2.msra.mxu0 0.0
        %1147 = vmatprep.subr.mxu0 0.0
        %1148 = vmatpush2.msra.mxu0 0.0
        %1149 = vmatprep.subr.mxu0 0.0
        %1150 = vmatpush2.msra.mxu0 0.0
        %1151 = vmatprep.subr.mxu0 0.0
        %1152 = vmatpush2.msra.mxu0 0.0
        %1153 = vmatprep.subr.mxu0 0.0
        %1154 = vmatpush2.msra.mxu0 0.0
        %1155 = vmatprep.subr.mxu0 0.0
        %1156 = vmatpush2.msra.mxu0 0.0
        %1157 = vmatprep.subr.mxu0 0.0
        %1158 = vmatpush2.msra.mxu0 0.0
        %1159 = vmatprep.subr.mxu0 0.0
        %1160 = vmatpush2.msra.mxu0 0.0
        %1161 = vmatprep.subr.mxu0 0.0
        %1162 = vmatpush2.msra.mxu0 0.0
        %1163 = vmatprep.subr.mxu0 0.0
        %1164 = vmatpush2.msra.mxu0 0.0
        %1165 = vmatprep.subr.mxu0 0.0
        %1166 = vmatpush2.msra.mxu0 0.0
        %1167 = vmatprep.subr.mxu0 0.0
        %1168 = vmatpush2.msra.mxu0 0.0
        %1169 = vmatprep.subr.mxu0 0.0
        %1170 = vmatpush2.msra.mxu0 0.0
        %1171 = vmatprep.subr.mxu0 0.0
        %1172 = vmatpush2.msra.mxu0 0.0
        %1173 = vmatprep.mubr.f32.mxu0 0.0
        %1174 = vmatmul.mubr.f32.gmra.mxu0 %v1107
        %v1175 = vpop.f32.mrf.mxu0
        %v1176 = vadd.f32 %v1105, %v1175
        %v1177 = vpop.f32.mrf.mxu0
        %1178 = vdwg.mxu0
        %1179 = vst [vmem:[%s420] sm:$0x1] %v1176
        %s1180 = sand.u32 %s296, 1
        %s1181 = scalar_lea.sflag [#allocation3], %s1180
        %s1182 = sand.u32 %s296, 1
        %s1183 = scalar_lea.vmem [#allocation2], %s1182
        // Predicated region
        $region69: #{tpu_custom_call.1} parent=67 // pred_check
          %p1184 = pneg %p306
        $region70: #{tpu_custom_call.1} parent=67 // pred_check_branch
          %1186 = sbr.rel (%p1184) target = $region72
        $region71: #{tpu_custom_call.1} parent=67 // pred_region
          %s1188 = ssub.s32 16, 16
          %1189 = vsyncadd %s1181, %s1188
          %s1190 = smul.addr %s26, 16
          %s1191 = scalar_lea.hbm %s12, %s1190
          %s1193 = sshll.u32 %s1183, 4
          %s1194 = int_to_ptr.vmem [resolvable:$true] %s1193
          %1196 = dma.vmem_to_hbm [thread:$0]  %s1194, 16, %s1191, %s1181
        $region72: #{tpu_custom_call.1} parent=67 // pred_fallthru
          _
      $region68: #{tpu_custom_call.1} parent=5 // pred_fallthru
        _
      %p1197 = scmp.le.s32.totalorder 2, %s21
      // Predicated region
      $region73: #{tpu_custom_call.1} parent=5 // pred_check
        %p1198 = pneg %p1197
      $region74: #{tpu_custom_call.1} parent=5 // pred_check_branch
        %1200 = sbr.rel (%p1198) target = $region76
      $region75: #{tpu_custom_call.1} parent=5 // pred_region
        %s1201 = ssub.s32 %s21, 2
        // Predicated region
        $region77: #{tpu_custom_call.1} parent=75 // pred_check
          %p1202 = pneg %p312
        $region78: #{tpu_custom_call.1} parent=75 // pred_check_branch
          %1204 = sbr.rel (%p1202) target = $region80
        $region79: #{tpu_custom_call.1} parent=75 // pred_region
          %s1205 = sand.u32 %s297, 1
          %s1206 = scalar_lea.sflag [#allocation3], %s1205
          %s1207 = sand.u32 %s297, 1
          %s1208 = scalar_lea.vmem [#allocation2], %s1207
          %1209 = dma.done %s1206, 16
        $region80: #{tpu_custom_call.1} parent=75 // pred_fallthru
          _
      $region76: #{tpu_custom_call.1} parent=5 // pred_fallthru
        _
    $region6: #{tpu_custom_call.1} parent=1 // loop_footer
      %s25 = sadd.s32 1, %s21
    $region7: #{tpu_custom_call.1} parent=1 // loop_footer_branch
      %20 = sbr.rel target = $region3
    $region8: #{tpu_custom_call.1} parent=1 // loop_exit
      _
    %1210 = vsyncpa [#allocation3], 1
    %s1211 = scalar_lea.sflag [#allocation3], 1
    %1212 = vsyncpa %s1211, 1

</llo_original>
